<compile_context>
chip_gen: v6e
topology: v6e:2x2x1
jax: 0.10.0
libtpu: 0.0.40
codegen_flags: <defaults>
</compile_context>

<pallas_src>
import math
import jax
import jax.numpy as jnp
from jax.experimental import pallas as pl
from jax.experimental.pallas import tpu as pltpu


def _round_up(a: int, b: int) -> int:
    return ((a + b - 1) // b) * b


def _vmem_capacity_bytes() -> int:
    """Per-core VMEM capacity; conservative fallback (v7x per-TC) if unknown."""
    try:
        return int(pltpu.get_tpu_info().vmem_capacity_bytes)
    except Exception:
        return 64 * 2 ** 20


def _prepare(a, shape, dtype):
    """Cast then zero-pad to `shape`, skipping stages that are no-ops."""
    if a.dtype != dtype:
        a = a.astype(dtype)                    # cast first -> padded buffer is narrow
    if a.shape != shape:
        a = jnp.pad(a, [(0, s - d) for s, d in zip(shape, a.shape)])
    return a


# --------------------------------------------------------------------------
# Stage 1: support = x @ W   (computed exactly once; W resident per step)
# --------------------------------------------------------------------------
def _make_support_kernel(precision):
    def kernel(x_ref, w_ref, o_ref):
        o_ref[...] = jnp.dot(
            x_ref[...], w_ref[...],
            preferred_element_type=jnp.float32,
            precision=precision,
        ).astype(o_ref.dtype)
    return kernel


# --------------------------------------------------------------------------
# Stage 2: output = adj @ support (+ bias), output-stationary accumulation
# --------------------------------------------------------------------------
def _make_gcn_kernel(precision, with_bias):
    def kernel(adj_ref, sup_ref, *rest):
        if with_bias:
            b_ref, o_ref, acc_ref = rest
        else:
            o_ref, acc_ref = rest

        k = pl.program_id(1)

        @pl.when(k == 0)
        def _init():
            acc_ref[...] = jnp.zeros_like(acc_ref)

        s = sup_ref[...]
        a = adj_ref[...].astype(s.dtype)   # bf16 adj streamed from HBM, f32 math
        acc_ref[...] += jnp.dot(a, s, preferred_element_type=jnp.float32,
                                precision=precision)

        @pl.when(k == pl.num_programs(1) - 1)
        def _finalize():
            r = acc_ref[...]
            if with_bias:
                r = r + b_ref[...]          # bias add hoisted out of the k loop
            o_ref[...] = r.astype(o_ref.dtype)
    return kernel


def graph_convolution(x, weight, adj, bias=None, *,
                      adj_dtype=jnp.bfloat16,
                      support_dtype=jnp.float32,
                      precision=None,
                      tm_max=None, tk_max=1024):
    """Pallas GCN forward.

    x:[N,F_in], weight:[F_in,F_out], adj:[N,N] dense, bias:[F_out] or None.
    adj_dtype:     storage/stream dtype for adj (bf16 default: kernel is HBM
                   bound on adj; accumulation stays f32, output is f32).
    support_dtype: dtype of the x@W intermediate (f32 default for accuracy).
    precision:     lax.Precision for the matmuls (e.g. HIGHEST for bit-level
                   parity with torch.mm); None = TPU default.
    Returns f32 [N, F_out].
    """
    N, f_in = x.shape
    f_out = weight.shape[1]

    cap = _vmem_capacity_bytes()
    budget = int(0.70 * cap)                       # tile-fitting budget
    vmem_cap_req = int(0.85 * cap)                 # max vmem_limit_bytes request
    if tm_max is None:
        tm_max = 1024 if cap >= 96 * 2 ** 20 else 512   # bigger tiles on v5e/v6e

    # Lane-dense feature dims.  f_out padded to 256-multiples above 128 so the
    # 256x256 MXUs (v6e/v7x) are fully used once HBM traffic is minimized.
    f_in_p = _round_up(f_in, 128)
    f_out_p = 128 if f_out <= 128 else _round_up(f_out, 256)

    adj_it = jnp.dtype(adj_dtype).itemsize
    sup_it = jnp.dtype(support_dtype).itemsize

    def main_est(tm_, tk_):
        return (2 * tm_ * tk_ * adj_it          # adj tiles (double-buffered)
                + 2 * tk_ * f_out_p * sup_it    # support tiles
                + 2 * tm_ * f_out_p * 4         # output tiles
                + tm_ * f_out_p * 4             # f32 accumulator scratch
                + tm_ * tk_ * 4                 # in-kernel f32 upcast of adj tile
                + tm_ * f_out_p * 4             # dot result before +=
                + 2 * f_out_p * 4)              # bias

    tm = min(tm_max, _round_up(N, 8))            # output-row tile (sublane dim)
    tk = min(tk_max, _round_up(N, 128))          # contraction tile (lane dim of adj)
    while main_est(tm, tk) > budget:             # shrink until the tiles fit VMEM
        if tk > 128:
            tk = max(128, (tk // 256) * 128)
        elif tm > 8:
            tm = max(8, (tm // 16) * 8)
        else:
            break

    # v7x megacore: make sure the "parallel" row axis has >=2 tiles so both
    # TensorCores get work (harmless one extra grid step elsewhere).
    if N > 8 and -(-N // tm) < 2:
        tm = _round_up((N + 1) // 2, 8)

    n_rows = _round_up(N, tm)
    n_cols = _round_up(N, tk)
    grid = (n_rows // tm, n_cols // tk)

    # ---- padding / casting (skipped when already aligned) -------------------
    x_p = _prepare(x, (n_cols, f_in_p), x.dtype)
    w_p = _prepare(weight, (f_in_p, f_out_p), weight.dtype)
    adj_p = _prepare(adj, (n_rows, n_cols), adj_dtype)

    # ---- stage 1: support = x @ W -------------------------------------------
    tms = 128
    for cand in (512, 256):
        if n_cols % cand == 0:
            tms = cand
            break
    x_it = jnp.dtype(x_p.dtype).itemsize
    w_it = jnp.dtype(w_p.dtype).itemsize
    sup_est = (2 * tms * f_in_p * x_it + 2 * f_in_p * f_out_p * w_it
               + 2 * tms * f_out_p * sup_it + tms * f_out_p * 4)

    support = pl.pallas_call(
        _make_support_kernel(precision),
        out_shape=jax.ShapeDtypeStruct((n_cols, f_out_p), support_dtype),
        grid_spec=pltpu.PrefetchScalarGridSpec(
            num_scalar_prefetch=0,
            grid=(n_cols // tms,),
            in_specs=[pl.BlockSpec((tms, f_in_p), lambda i: (i, 0)),
                      pl.BlockSpec((f_in_p, f_out_p), lambda i: (0, 0))],
            out_specs=pl.BlockSpec((tms, f_out_p), lambda i: (i, 0)),
        ),
        compiler_params=pltpu.CompilerParams(
            dimension_semantics=("parallel",),
            vmem_limit_bytes=min(vmem_cap_req, max(32 * 2 ** 20, 2 * sup_est))),
        cost_estimate=pl.CostEstimate(
            flops=2 * N * f_in * f_out,
            transcendentals=0,
            bytes_accessed=(N * f_in * x_it + f_in * f_out * w_it
                            + N * f_out * sup_it)),
    )(x_p, w_p)

    # ---- stage 2: output = adj @ support (+ bias) ----------------------------
    in_specs = [
        pl.BlockSpec((tm, tk), lambda i, k: (i, k)),        # adj tile stream
        pl.BlockSpec((tk, f_out_p), lambda i, k: (k, 0)),   # support follows k
    ]
    inputs = [adj_p, support]
    if bias is not None:
        b_p = _prepare(bias.astype(jnp.float32).reshape(1, f_out),
                       (1, f_out_p), jnp.float32)
        in_specs.append(pl.BlockSpec((1, f_out_p), lambda i, k: (0, 0)))
        inputs.append(b_p)

    kernel = _make_gcn_kernel(precision, bias is not None)
    vmem_limit = min(vmem_cap_req, max(32 * 2 ** 20, 2 * main_est(tm, tk)))

    out_bytes = (N * N * adj_it + N * f_out * sup_it + N * f_out * 4
                 + (f_out * 4 if bias is not None else 0))

    out_p = pl.pallas_call(
        kernel,
        out_shape=jax.ShapeDtypeStruct((n_rows, f_out_p), jnp.float32),
        grid_spec=pltpu.PrefetchScalarGridSpec(
            num_scalar_prefetch=0,
            grid=grid,
            in_specs=in_specs,
            out_specs=pl.BlockSpec((tm, f_out_p), lambda i, k: (i, 0)),
            scratch_shapes=[pltpu.VMEM((tm, f_out_p), jnp.float32)],
        ),
        compiler_params=pltpu.CompilerParams(
            dimension_semantics=("parallel", "arbitrary"),
            vmem_limit_bytes=vmem_limit),
        cost_estimate=pl.CostEstimate(
            flops=2 * N * N * f_out,
            transcendentals=0,
            bytes_accessed=out_bytes),
    )(*inputs)

    # Skip the (whole-result HBM copy) un-pad slice when already tile-aligned.
    if n_rows == N and f_out_p == f_out:
        return out_p
    return out_p[:N, :f_out]


if __name__ == "__main__":
    # Small shapes consistent with the module's forward:
    #   N = 16 graph nodes, in_features = 32, out_features = 32.
    N, in_features, out_features = 16, 32, 32

    key = jax.random.PRNGKey(0)
    kx, kadj, kw, kb = jax.random.split(key, 4)

    # Deterministic parameter init mirroring reset_parameters():
    # uniform(-stdv, stdv) with stdv = 1/sqrt(out_features).
    stdv = 1.0 / math.sqrt(out_features)
    weight = jax.random.uniform(kw, (in_features, out_features),
                                minval=-stdv, maxval=stdv, dtype=jnp.float32)
    bias = jax.random.uniform(kb, (out_features,),
                              minval=-stdv, maxval=stdv, dtype=jnp.float32)

    x = jax.random.uniform(kx, (N, in_features), dtype=jnp.float32)
    adj_raw = jax.random.uniform(kadj, (N, N), dtype=jnp.float32)
    adj = adj_raw / jnp.sum(adj_raw, axis=1, keepdims=True)  # row-normalized

    # Pure-JAX references (torch.mm / torch.spmm semantics).
    ref = adj @ (x @ weight) + bias
    ref_nobias = adj @ (x @ weight)

    gcn = jax.jit(graph_convolution,
                  static_argnames=("adj_dtype", "support_dtype", "precision",
                                   "tm_max", "tk_max"))

    # f32 adjacency path (tight check against the same-precision JAX reference).
    out_f32 = jax.block_until_ready(gcn(x, weight, adj, bias,
                                        adj_dtype=jnp.float32))
    assert out_f32.shape == (N, out_features)
    assert jnp.allclose(out_f32, ref, atol=1e-4, rtol=1e-4)

    # Default path: bf16 adjacency stream (halves HBM bytes of the HBM-bound
    # matmul; f32 support, f32 accumulation) — loose check.
    out_def = jax.block_until_ready(gcn(x, weight, adj, bias))
    assert out_def.shape == (N, out_features)
    assert jnp.allclose(out_def, ref, atol=5e-2, rtol=5e-2)

    # bias=False path (no bias DMA / add inside the kernel).
    out_nb = jax.block_until_ready(gcn(x, weight, adj, None,
                                       adj_dtype=jnp.float32))
    assert jnp.allclose(out_nb, ref_nobias, atol=1e-4, rtol=1e-4)

    print("KERNEL_OK")
</pallas_src>

<mosaic_0001>
module attributes {stable_mosaic.version = 11 : i64} {
  func.func @kernel(%arg0: i32, %arg1: memref<128x128xf32, #tpu.memory_space<vmem>>, %arg2: memref<128x128xf32, #tpu.memory_space<vmem>>, %arg3: memref<128x128xf32, #tpu.memory_space<vmem>>) attributes {dimension_semantics = [#tpu.dimension_semantics<parallel>], iteration_bounds = array<i64: 1>, scalar_prefetch = 0 : i64, scratch_operands = 0 : i64, tpu.core_type = #tpu.core_type<tc>, window_params = [{transform_indices = @transform_0, window_bounds = array<i64: 128, 128>}, {pipeline_mode = #tpu.pipeline_mode<synchronous>, transform_indices = @transform_1, window_bounds = array<i64: 128, 128>}, {transform_indices = @transform_2, window_bounds = array<i64: 128, 128>}]} {
    %c0 = arith.constant 0 : index
    %c0_0 = arith.constant 0 : index
    %0 = vector.load %arg1[%c0, %c0_0] : memref<128x128xf32, #tpu.memory_space<vmem>>, vector<128x128xf32>
    %c0_1 = arith.constant 0 : index
    %c0_2 = arith.constant 0 : index
    %1 = vector.load %arg2[%c0_1, %c0_2] : memref<128x128xf32, #tpu.memory_space<vmem>>, vector<128x128xf32>
    %cst = arith.constant dense<0.000000e+00> : vector<128x128xf32>
    %2 = tpu.matmul %0, %1, %cst {dimension_numbers = #tpu.dot_dimension_numbers<[1], [0], [0], [1], [0, 0, 1, 1], [], []>} : vector<128x128xf32>, vector<128x128xf32>, vector<128x128xf32> -> vector<128x128xf32>
    %c0_3 = arith.constant 0 : index
    %c0_4 = arith.constant 0 : index
    %3 = vector.load %arg3[%c0_3, %c0_4] : memref<128x128xf32, #tpu.memory_space<vmem>>, vector<128x128xf32>
    tpu.vector_store %arg3[%c0_3, %c0_4], %2 {strides = array<i32>} : memref<128x128xf32, #tpu.memory_space<vmem>>, vector<128x128xf32>,
    return
  }
  func.func @transform_0(%arg0: i32) -> (i32, i32) {
    %c0_i32 = arith.constant 0 : i32
    %c0_i32_0 = arith.constant 0 : i32
    return %arg0, %c0_i32 : i32, i32
  }
  func.func @transform_1(%arg0: i32) -> (i32, i32) {
    %c0_i32 = arith.constant 0 : i32
    %c0_i32_0 = arith.constant 0 : i32
    %c0_i32_1 = arith.constant 0 : i32
    return %c0_i32, %c0_i32_0 : i32, i32
  }
  func.func @transform_2(%arg0: i32) -> (i32, i32) {
    %c0_i32 = arith.constant 0 : i32
    %c0_i32_0 = arith.constant 0 : i32
    return %arg0, %c0_i32 : i32, i32
  }
}

module attributes {stable_mosaic.version = 11 : i64} {
  func.func @kernel(%arg0: i32, %arg1: i32, %arg2: memref<8x128xf32, #tpu.memory_space<vmem>>, %arg3: memref<128x128xf32, #tpu.memory_space<vmem>>, %arg4: memref<1x128xf32, #tpu.memory_space<vmem>>, %arg5: memref<8x128xf32, #tpu.memory_space<vmem>>, %arg6: memref<8x128xf32, #tpu.memory_space<vmem>>) attributes {dimension_semantics = [#tpu.dimension_semantics<parallel>, #tpu.dimension_semantics<arbitrary>], iteration_bounds = array<i64: 2, 1>, scalar_prefetch = 0 : i64, scratch_operands = 1 : i64, tpu.core_type = #tpu.core_type<tc>, window_params = [{transform_indices = @transform_0, window_bounds = array<i64: 8, 128>}, {transform_indices = @transform_1, window_bounds = array<i64: 128, 128>}, {pipeline_mode = #tpu.pipeline_mode<synchronous>, transform_indices = @transform_2, window_bounds = array<i64: 1, 128>}, {transform_indices = @transform_3, window_bounds = array<i64: 8, 128>}]} {
    %c0_i32 = arith.constant 0 : i32
    %0 = arith.cmpi eq, %arg1, %c0_i32 : i32
    %1 = arith.extui %0 : i1 to i32
    %c0_i32_0 = arith.constant 0 : i32
    %2 = arith.cmpi ne, %1, %c0_i32_0 : i32
    scf.if %2 {
      %cst_10 = arith.constant 0.000000e+00 : f32
      %12 = vector.broadcast %cst_10 : f32 to vector<8x128xf32>
      %c0_11 = arith.constant 0 : index
      %c0_12 = arith.constant 0 : index
      %13 = vector.load %arg6[%c0_11, %c0_12] : memref<8x128xf32, #tpu.memory_space<vmem>>, vector<8x128xf32>
      tpu.vector_store %arg6[%c0_11, %c0_12], %12 {strides = array<i32>} : memref<8x128xf32, #tpu.memory_space<vmem>>, vector<8x128xf32>,
    } else {
    }
    %c0 = arith.constant 0 : index
    %c0_1 = arith.constant 0 : index
    %3 = vector.load %arg3[%c0, %c0_1] : memref<128x128xf32, #tpu.memory_space<vmem>>, vector<128x128xf32>
    %c0_2 = arith.constant 0 : index
    %c0_3 = arith.constant 0 : index
    %4 = vector.load %arg2[%c0_2, %c0_3] : memref<8x128xf32, #tpu.memory_space<vmem>>, vector<8x128xf32>
    %c0_4 = arith.constant 0 : index
    %c0_5 = arith.constant 0 : index
    %5 = vector.load %arg6[%c0_4, %c0_5] : memref<8x128xf32, #tpu.memory_space<vmem>>, vector<8x128xf32>
    %cst = arith.constant dense<0.000000e+00> : vector<8x128xf32>
    %6 = tpu.matmul %4, %3, %cst {dimension_numbers = #tpu.dot_dimension_numbers<[1], [0], [0], [1], [0, 0, 1, 1], [], []>} : vector<8x128xf32>, vector<128x128xf32>, vector<8x128xf32> -> vector<8x128xf32>
    %7 = arith.addf %5, %6 : vector<8x128xf32>
    %c0_6 = arith.constant 0 : index
    %c0_7 = arith.constant 0 : index
    %8 = vector.load %arg6[%c0_6, %c0_7] : memref<8x128xf32, #tpu.memory_space<vmem>>, vector<8x128xf32>
    tpu.vector_store %arg6[%c0_6, %c0_7], %7 {strides = array<i32>} : memref<8x128xf32, #tpu.memory_space<vmem>>, vector<8x128xf32>,
    %c0_i32_8 = arith.constant 0 : i32
    %9 = arith.cmpi eq, %arg1, %c0_i32_8 : i32
    %10 = arith.extui %9 : i1 to i32
    %c0_i32_9 = arith.constant 0 : i32
    %11 = arith.cmpi ne, %10, %c0_i32_9 : i32
    scf.if %11 {
      %c0_10 = arith.constant 0 : index
      %c0_11 = arith.constant 0 : index
      %12 = vector.load %arg6[%c0_10, %c0_11] : memref<8x128xf32, #tpu.memory_space<vmem>>, vector<8x128xf32>
      %c0_12 = arith.constant 0 : index
      %c0_13 = arith.constant 0 : index
      %13 = vector.load %arg4[%c0_12, %c0_13] : memref<1x128xf32, #tpu.memory_space<vmem>>, vector<1x128xf32>
      %14 = vector.broadcast %13 : vector<1x128xf32> to vector<8x128xf32>
      %15 = arith.addf %12, %14 : vector<8x128xf32>
      %c0_14 = arith.constant 0 : index
      %c0_15 = arith.constant 0 : index
      %16 = vector.load %arg5[%c0_14, %c0_15] : memref<8x128xf32, #tpu.memory_space<vmem>>, vector<8x128xf32>
      tpu.vector_store %arg5[%c0_14, %c0_15], %15 {strides = array<i32>} : memref<8x128xf32, #tpu.memory_space<vmem>>, vector<8x128xf32>,
    } else {
    }
    return
  }
  func.func @transform_0(%arg0: i32, %arg1: i32) -> (i32, i32) {
    %c0_i32 = arith.constant 0 : i32
    return %arg0, %arg1 : i32, i32
  }
  func.func @transform_1(%arg0: i32, %arg1: i32) -> (i32, i32) {
    %c0_i32 = arith.constant 0 : i32
    %c0_i32_0 = arith.constant 0 : i32
    return %arg1, %c0_i32 : i32, i32
  }
  func.func @transform_2(%arg0: i32, %arg1: i32) -> (i32, i32) {
    %c0_i32 = arith.constant 0 : i32
    %c0_i32_0 = arith.constant 0 : i32
    %c0_i32_1 = arith.constant 0 : i32
    return %c0_i32, %c0_i32_0 : i32, i32
  }
  func.func @transform_3(%arg0: i32, %arg1: i32) -> (i32, i32) {
    %c0_i32 = arith.constant 0 : i32
    %c0_i32_0 = arith.constant 0 : i32
    return %arg0, %c0_i32 : i32, i32
  }
}

</mosaic_0001>

<llo_original>
// kernel: graph_convolution.2
$region0: #{graph_convolution.2}
  #allocation0 [shape = 'u32[]', space=smem, size = 0x4, offset = 0x4, fixed_abs, tag = 'smem constant byte address 0x4 - core index']
  #allocation1 [shape = 'u32[144,128]{1,0:T(1,128)}', space=vmem, size = 0x12000, scoped, tag = 'internal scratch']
  %s0 = inlined_call_operand.vmem [shape: f32[128,128], index: 0, kind: input, shape index: {}]
  %s1 = inlined_call_operand.vmem [shape: f32[128,128], index: 1, kind: input, shape index: {}]
  %s2 = inlined_call_operand.vmem [shape: f32[128,128], index: 2, kind: output, shape index: {}]
  %s3 = sld [smem:[#allocation0]]
  $region18: #{graph_convolution.2} parent=0
    _
  %s5 = ssub.s32 1, %s3
  %s6 = scalar_select 0, %s5, %s3
  // Predicated region
  $region2: #{graph_convolution.2} parent=0 // pred_check
    _
  $region3: #{graph_convolution.2} parent=0 // pred_check_branch
    %8 = sbr.rel (0) target = $region5
  $region4: #{graph_convolution.2} parent=0 // pred_region
    _
  $region5: #{graph_convolution.2} parent=0 // pred_fallthru
    _
  // Predicated region
  $region6: #{graph_convolution.2} parent=0 // pred_check
    _
  $region7: #{graph_convolution.2} parent=0 // pred_check_branch
    %10 = sbr.rel (0) target = $region9
  $region8: #{graph_convolution.2} parent=0 // pred_region
    _
  $region9: #{graph_convolution.2} parent=0 // pred_fallthru
    _
  %v11 = vld [vmem:[%s0] sm:$0xff]
  %v12 = vld [vmem:[%s0 + $0x8] sm:$0xff]
  %v13 = vld [vmem:[%s0 + $0x10] sm:$0xff]
  %v14 = vld [vmem:[%s0 + $0x18] sm:$0xff]
  %v15 = vld [vmem:[%s0 + $0x20] sm:$0xff]
  %v16 = vld [vmem:[%s0 + $0x28] sm:$0xff]
  %v17 = vld [vmem:[%s0 + $0x30] sm:$0xff]
  %v18 = vld [vmem:[%s0 + $0x38] sm:$0xff]
  %v19 = vld [vmem:[%s0 + $0x40] sm:$0xff]
  %v20 = vld [vmem:[%s0 + $0x48] sm:$0xff]
  %v21 = vld [vmem:[%s0 + $0x50] sm:$0xff]
  %v22 = vld [vmem:[%s0 + $0x58] sm:$0xff]
  %v23 = vld [vmem:[%s0 + $0x60] sm:$0xff]
  %v24 = vld [vmem:[%s0 + $0x68] sm:$0xff]
  %v25 = vld [vmem:[%s0 + $0x70] sm:$0xff]
  %v26 = vld [vmem:[%s0 + $0x78] sm:$0xff]
  %v27 = vld [vmem:[%s1] sm:$0xff]
  %v28 = vld [vmem:[%s1 + $0x8] sm:$0xff]
  %v29 = vld [vmem:[%s1 + $0x10] sm:$0xff]
  %v30 = vld [vmem:[%s1 + $0x18] sm:$0xff]
  %v31 = vld [vmem:[%s1 + $0x20] sm:$0xff]
  %v32 = vld [vmem:[%s1 + $0x28] sm:$0xff]
  %v33 = vld [vmem:[%s1 + $0x30] sm:$0xff]
  %v34 = vld [vmem:[%s1 + $0x38] sm:$0xff]
  %v35 = vld [vmem:[%s1 + $0x40] sm:$0xff]
  %v36 = vld [vmem:[%s1 + $0x48] sm:$0xff]
  %v37 = vld [vmem:[%s1 + $0x50] sm:$0xff]
  %v38 = vld [vmem:[%s1 + $0x58] sm:$0xff]
  %v39 = vld [vmem:[%s1 + $0x60] sm:$0xff]
  %v40 = vld [vmem:[%s1 + $0x68] sm:$0xff]
  %v41 = vld [vmem:[%s1 + $0x70] sm:$0xff]
  %v42 = vld [vmem:[%s1 + $0x78] sm:$0xff]
  %43 = vmatprep.subr.mxu0 0.0
  %44 = vmatpush1.msra.mxu0 %v42
  %45 = vmatprep.subr.mxu0 0.0
  %46 = vmatpush1.msra.mxu0 %v41
  %47 = vmatprep.subr.mxu0 0.0
  %48 = vmatpush1.msra.mxu0 %v40
  %49 = vmatprep.subr.mxu0 0.0
  %50 = vmatpush1.msra.mxu0 %v39
  %51 = vmatprep.subr.mxu0 0.0
  %52 = vmatpush1.msra.mxu0 %v38
  %53 = vmatprep.subr.mxu0 0.0
  %54 = vmatpush1.msra.mxu0 %v37
  %55 = vmatprep.subr.mxu0 0.0
  %56 = vmatpush1.msra.mxu0 %v36
  %57 = vmatprep.subr.mxu0 0.0
  %58 = vmatpush1.msra.mxu0 %v35
  %59 = vmatprep.subr.mxu0 0.0
  %60 = vmatpush1.msra.mxu0 %v34
  %61 = vmatprep.subr.mxu0 0.0
  %62 = vmatpush1.msra.mxu0 %v33
  %63 = vmatprep.subr.mxu0 0.0
  %64 = vmatpush1.msra.mxu0 %v32
  %65 = vmatprep.subr.mxu0 0.0
  %66 = vmatpush1.msra.mxu0 %v31
  %67 = vmatprep.subr.mxu0 0.0
  %68 = vmatpush1.msra.mxu0 %v30
  %69 = vmatprep.subr.mxu0 0.0
  %70 = vmatpush1.msra.mxu0 %v29
  %71 = vmatprep.subr.mxu0 0.0
  %72 = vmatpush1.msra.mxu0 %v28
  %73 = vmatprep.subr.mxu0 0.0
  %74 = vmatpush1.msra.mxu0 %v27
  %75 = vmatprep.subr.mxu0 0.0
  %76 = vmatpush2.msra.mxu0 0.0
  %77 = vmatprep.subr.mxu0 0.0
  %78 = vmatpush2.msra.mxu0 0.0
  %79 = vmatprep.subr.mxu0 0.0
  %80 = vmatpush2.msra.mxu0 0.0
  %81 = vmatprep.subr.mxu0 0.0
  %82 = vmatpush2.msra.mxu0 0.0
  %83 = vmatprep.subr.mxu0 0.0
  %84 = vmatpush2.msra.mxu0 0.0
  %85 = vmatprep.subr.mxu0 0.0
  %86 = vmatpush2.msra.mxu0 0.0
  %87 = vmatprep.subr.mxu0 0.0
  %88 = vmatpush2.msra.mxu0 0.0
  %89 = vmatprep.subr.mxu0 0.0
  %90 = vmatpush2.msra.mxu0 0.0
  %91 = vmatprep.subr.mxu0 0.0
  %92 = vmatpush2.msra.mxu0 0.0
  %93 = vmatprep.subr.mxu0 0.0
  %94 = vmatpush2.msra.mxu0 0.0
  %95 = vmatprep.subr.mxu0 0.0
  %96 = vmatpush2.msra.mxu0 0.0
  %97 = vmatprep.subr.mxu0 0.0
  %98 = vmatpush2.msra.mxu0 0.0
  %99 = vmatprep.subr.mxu0 0.0
  %100 = vmatpush2.msra.mxu0 0.0
  %101 = vmatprep.subr.mxu0 0.0
  %102 = vmatpush2.msra.mxu0 0.0
  %103 = vmatprep.subr.mxu0 0.0
  %104 = vmatpush2.msra.mxu0 0.0
  %105 = vmatprep.subr.mxu0 0.0
  %106 = vmatpush2.msra.mxu0 0.0
  %107 = vmatprep.mubr.f32.mxu0 0.0
  %108 = vmatmul.mubr.f32.gmra.mxu0 %v11
  %v109 = vpop.f32.mrf.mxu0
  %v110 = vadd.f32 0.0, %v109
  %v111 = vpop.f32.mrf.mxu0
  %112 = vmatprep.mubr.f32.mxu0 0.0
  %113 = vmatmul.mubr.f32.gmra.mxu0 %v12
  %v114 = vpop.f32.mrf.mxu0
  %v115 = vadd.f32 0.0, %v114
  %v116 = vpop.f32.mrf.mxu0
  %117 = vmatprep.mubr.f32.mxu0 0.0
  %118 = vmatmul.mubr.f32.gmra.mxu0 %v13
  %v119 = vpop.f32.mrf.mxu0
  %v120 = vadd.f32 0.0, %v119
  %v121 = vpop.f32.mrf.mxu0
  %122 = vmatprep.mubr.f32.mxu0 0.0
  %123 = vmatmul.mubr.f32.gmra.mxu0 %v14
  %v124 = vpop.f32.mrf.mxu0
  %v125 = vadd.f32 0.0, %v124
  %v126 = vpop.f32.mrf.mxu0
  %127 = vmatprep.mubr.f32.mxu0 0.0
  %128 = vmatmul.mubr.f32.gmra.mxu0 %v15
  %v129 = vpop.f32.mrf.mxu0
  %v130 = vadd.f32 0.0, %v129
  %v131 = vpop.f32.mrf.mxu0
  %132 = vmatprep.mubr.f32.mxu0 0.0
  %133 = vmatmul.mubr.f32.gmra.mxu0 %v16
  %v134 = vpop.f32.mrf.mxu0
  %v135 = vadd.f32 0.0, %v134
  %v136 = vpop.f32.mrf.mxu0
  %137 = vmatprep.mubr.f32.mxu0 0.0
  %138 = vmatmul.mubr.f32.gmra.mxu0 %v17
  %v139 = vpop.f32.mrf.mxu0
  %v140 = vadd.f32 0.0, %v139
  %v141 = vpop.f32.mrf.mxu0
  %142 = vmatprep.mubr.f32.mxu0 0.0
  %143 = vmatmul.mubr.f32.gmra.mxu0 %v18
  %v144 = vpop.f32.mrf.mxu0
  %v145 = vadd.f32 0.0, %v144
  %v146 = vpop.f32.mrf.mxu0
  %147 = vmatprep.mubr.f32.mxu0 0.0
  %148 = vmatmul.mubr.f32.gmra.mxu0 %v19
  %v149 = vpop.f32.mrf.mxu0
  %v150 = vadd.f32 0.0, %v149
  %v151 = vpop.f32.mrf.mxu0
  %152 = vmatprep.mubr.f32.mxu0 0.0
  %153 = vmatmul.mubr.f32.gmra.mxu0 %v20
  %v154 = vpop.f32.mrf.mxu0
  %v155 = vadd.f32 0.0, %v154
  %v156 = vpop.f32.mrf.mxu0
  %157 = vmatprep.mubr.f32.mxu0 0.0
  %158 = vmatmul.mubr.f32.gmra.mxu0 %v21
  %v159 = vpop.f32.mrf.mxu0
  %v160 = vadd.f32 0.0, %v159
  %v161 = vpop.f32.mrf.mxu0
  %162 = vmatprep.mubr.f32.mxu0 0.0
  %163 = vmatmul.mubr.f32.gmra.mxu0 %v22
  %v164 = vpop.f32.mrf.mxu0
  %v165 = vadd.f32 0.0, %v164
  %v166 = vpop.f32.mrf.mxu0
  %167 = vmatprep.mubr.f32.mxu0 0.0
  %168 = vmatmul.mubr.f32.gmra.mxu0 %v23
  %v169 = vpop.f32.mrf.mxu0
  %v170 = vadd.f32 0.0, %v169
  %v171 = vpop.f32.mrf.mxu0
  %172 = vmatprep.mubr.f32.mxu0 0.0
  %173 = vmatmul.mubr.f32.gmra.mxu0 %v24
  %v174 = vpop.f32.mrf.mxu0
  %v175 = vadd.f32 0.0, %v174
  %v176 = vpop.f32.mrf.mxu0
  %177 = vmatprep.mubr.f32.mxu0 0.0
  %178 = vmatmul.mubr.f32.gmra.mxu0 %v25
  %v179 = vpop.f32.mrf.mxu0
  %v180 = vadd.f32 0.0, %v179
  %v181 = vpop.f32.mrf.mxu0
  %182 = vmatprep.mubr.f32.mxu0 0.0
  %183 = vmatmul.mubr.f32.gmra.mxu0 %v26
  %v184 = vpop.f32.mrf.mxu0
  %v185 = vadd.f32 0.0, %v184
  %v186 = vpop.f32.mrf.mxu0
  %187 = vdwg.mxu0
  %188 = vst [vmem:[%s2] sm:$0xff] %v110
  %189 = vst [vmem:[%s2 + $0x8] sm:$0xff] %v115
  %190 = vst [vmem:[%s2 + $0x10] sm:$0xff] %v120
  %191 = vst [vmem:[%s2 + $0x18] sm:$0xff] %v125
  %192 = vst [vmem:[%s2 + $0x20] sm:$0xff] %v130
  %193 = vst [vmem:[%s2 + $0x28] sm:$0xff] %v135
  %194 = vst [vmem:[%s2 + $0x30] sm:$0xff] %v140
  %195 = vst [vmem:[%s2 + $0x38] sm:$0xff] %v145
  %196 = vst [vmem:[%s2 + $0x40] sm:$0xff] %v150
  %197 = vst [vmem:[%s2 + $0x48] sm:$0xff] %v155
  %198 = vst [vmem:[%s2 + $0x50] sm:$0xff] %v160
  %199 = vst [vmem:[%s2 + $0x58] sm:$0xff] %v165
  %200 = vst [vmem:[%s2 + $0x60] sm:$0xff] %v170
  %201 = vst [vmem:[%s2 + $0x68] sm:$0xff] %v175
  %202 = vst [vmem:[%s2 + $0x70] sm:$0xff] %v180
  %203 = vst [vmem:[%s2 + $0x78] sm:$0xff] %v185
  // Predicated region
  $region10: #{graph_convolution.2} parent=0 // pred_check
    _
  $region11: #{graph_convolution.2} parent=0 // pred_check_branch
    %205 = sbr.rel (0) target = $region13
  $region12: #{graph_convolution.2} parent=0 // pred_region
    _
  $region13: #{graph_convolution.2} parent=0 // pred_fallthru
    _
  // Predicated region
  $region14: #{graph_convolution.2} parent=0 // pred_check
    _
  $region15: #{graph_convolution.2} parent=0 // pred_check_branch
    %207 = sbr.rel (0) target = $region17
  $region16: #{graph_convolution.2} parent=0 // pred_region
    _
  $region17: #{graph_convolution.2} parent=0 // pred_fallthru
    _

// kernel: graph_convolution.3
$region0: #{graph_convolution.3}
  #allocation0 [shape = 'u32[]', space=smem, size = 0x4, offset = 0x4, fixed_abs, tag = 'smem constant byte address 0x4 - core index']
  #allocation1 [shape = 'u32[144,128]{1,0:T(1,128)}', space=vmem, size = 0x12000, scoped, tag = 'internal scratch']
  #allocation2 [shape = 'f32[8,128]{1,0:T(8,128)}', space=vmem, size = 0x1000, scoped, tag = 'scratch operand']
  %s0 = inlined_call_operand.vmem [shape: f32[16,128], index: 0, kind: input, shape index: {}]
  %s1 = inlined_call_operand.vmem [shape: f32[128,128], index: 1, kind: input, shape index: {}]
  %s2 = inlined_call_operand.vmem [shape: f32[1,128], index: 2, kind: input, shape index: {}]
  %s3 = inlined_call_operand.hbm [shape: f32[16,128], index: 3, kind: output, shape index: {}]
  %s4 = sld [smem:[#allocation0]]
  $region53: #{graph_convolution.3} parent=0
    _
  %s6 = ssub.s32 1, %s4
  %s7 = scalar_select 0, %s6, %s4
  $region1: #{graph_convolution.3} parent=0
    #allocation3 [shape = 'u8[8192]{0}', space=vmem, size = 0x2000, scoped, tag = 'output window, operand 0']
    #allocation4 [shape = 's32[2]{0}', space=sflag, size = 0x8, scoped, tag = 'scoped memory for graph_convolution.3']
    %8 = vsyncpa [#allocation4], 0
    %s9 = scalar_lea.sflag [#allocation4], 1
    %10 = vsyncpa %s9, 0
    loop: start=0, step=1, limit=4
    $region2: #{graph_convolution.3} parent=1 // loop_pre_header
      _
    $region3: #{graph_convolution.3} parent=1 // loop_header
      %s12 = sphi 0, %s16
      %p13 = scmp.ge.s32.totalorder %s12, 4
      %s19 = sphi 0, %s31
      %s20 = sphi 0, %s27
      %s21 = sphi 0, %s19
      %s22 = sphi 0, %s20
      %s23 = sphi 0, %s21
      %s24 = sphi 0, %s22
      %s36 = sphi 0, %s38
      %s39 = sphi 0, %s36
      %s40 = sphi 0, %s39
      %s56 = sphi 0, %s40
      %s62 = sphi 0, %s64
      %s65 = sphi 0, %s62
      %s66 = sphi 0, %s65
      %s82 = sphi 0, %s66
      %s86 = sphi 0, %s86
      %s88 = sphi 0, %s86
      %s89 = sphi 0, %s88
      %s103 = sphi 0, %s89
      %s109 = sphi 0, %s111
      %s112 = sphi 0, %s109
      %s113 = sphi 0, %s112
      %s129 = sphi 0, %s113
    $region4: #{graph_convolution.3} parent=1 // loop_header_branch
      %15 = sbr.rel (%p13) target = $region8
    $region5: #{graph_convolution.3} parent=1 // loop_body
      %s17 = ssub.s32 %s12, 1
      %s18 = ssub.s32 %s12, 2
      %s25 = sadd.s32 1, %s20
      %p26 = scmp.ge.s32.totalorder %s25, 1
      %s27 = scalar_select %p26, 0, %s25
      %s28 = sadd.s32 1, %s19
      %s29 = scalar_select %p26, %s28, %s19
      %p30 = scmp.ge.s32.totalorder %s29, 2
      %s31 = scalar_select %p30, 0, %s29
      %s32 = ssub.s32 %s19, %s31
      %s33 = ssub.s32 %s20, %s27
      %s34 = sor.u32 %s32, %s33
      %p35 = scmp.eq.s32.totalorder %s34, 0
      %s37 = sadd.s32 %s36, 1
      %s38 = scalar_select %p35, %s36, %s37
      %p41 = pneg %p35
      %p42 = scmp.eq.s32.totalorder %s12, 1
      %p43 = por %p41, %p42
      %p44 = scmp.ne.s32.totalorder %s36, %s39
      %p45 = scmp.eq.s32.totalorder %s12, 0
      %p46 = por %p44, %p45
      %p47 = scmp.ne.s32.totalorder %s36, %s39
      %p48 = scmp.eq.s32.totalorder %s17, 1
      %p49 = por %p47, %p48
      %p50 = scmp.ne.s32.totalorder %s39, %s40
      %p51 = scmp.eq.s32.totalorder %s17, 0
      %p52 = por %p50, %p51
      %p53 = scmp.ne.s32.totalorder %s39, %s40
      %p54 = scmp.eq.s32.totalorder %s18, 1
      %p55 = por %p53, %p54
      %p57 = scmp.ne.s32.totalorder %s40, %s56
      %p58 = scmp.eq.s32.totalorder %s18, 0
      %p59 = por %p57, %p58
      %s60 = ssub.s32 %s20, %s27
      %p61 = scmp.eq.s32.totalorder %s60, 0
      %s63 = sadd.s32 %s62, 1
      %s64 = scalar_select %p61, %s62, %s63
      %p67 = pneg %p61
      %p68 = scmp.eq.s32.totalorder %s12, 1
      %p69 = por %p67, %p68
      %p70 = scmp.ne.s32.totalorder %s62, %s65
      %p71 = scmp.eq.s32.totalorder %s12, 0
      %p72 = por %p70, %p71
      %p73 = scmp.ne.s32.totalorder %s62, %s65
      %p74 = scmp.eq.s32.totalorder %s17, 1
      %p75 = por %p73, %p74
      %p76 = scmp.ne.s32.totalorder %s65, %s66
      %p77 = scmp.eq.s32.totalorder %s17, 0
      %p78 = por %p76, %p77
      %p79 = scmp.ne.s32.totalorder %s65, %s66
      %p80 = scmp.eq.s32.totalorder %s18, 1
      %p81 = por %p79, %p80
      %p83 = scmp.ne.s32.totalorder %s66, %s82
      %p84 = scmp.eq.s32.totalorder %s18, 0
      %p85 = por %p83, %p84
      %s87 = sadd.s32 %s86, 1
      %p90 = scmp.eq.s32.totalorder %s12, 1
      %p91 = scmp.ne.s32.totalorder %s86, %s88
      %p92 = scmp.eq.s32.totalorder %s12, 0
      %p93 = por %p91, %p92
      %p94 = scmp.ne.s32.totalorder %s86, %s88
      %p95 = scmp.eq.s32.totalorder %s17, 1
      %p96 = por %p94, %p95
      %p97 = scmp.ne.s32.totalorder %s88, %s89
      %p98 = scmp.eq.s32.totalorder %s17, 0
      %p99 = por %p97, %p98
      %p100 = scmp.ne.s32.totalorder %s88, %s89
      %p101 = scmp.eq.s32.totalorder %s18, 1
      %p102 = por %p100, %p101
      %p104 = scmp.ne.s32.totalorder %s89, %s103
      %p105 = scmp.eq.s32.totalorder %s18, 0
      %p106 = por %p104, %p105
      %s107 = ssub.s32 %s19, %s31
      %p108 = scmp.eq.s32.totalorder %s107, 0
      %s110 = sadd.s32 %s109, 1
      %s111 = scalar_select %p108, %s109, %s110
      %p114 = pneg %p108
      %p115 = scmp.eq.s32.totalorder %s12, 1
      %p116 = por %p114, %p115
      %p117 = scmp.ne.s32.totalorder %s109, %s112
      %p118 = scmp.eq.s32.totalorder %s12, 0
      %p119 = por %p117, %p118
      %p120 = scmp.ne.s32.totalorder %s109, %s112
      %p121 = scmp.eq.s32.totalorder %s17, 1
      %p122 = por %p120, %p121
      %p123 = scmp.ne.s32.totalorder %s112, %s113
      %p124 = scmp.eq.s32.totalorder %s17, 0
      %p125 = por %p123, %p124
      %p126 = scmp.ne.s32.totalorder %s112, %s113
      %p127 = scmp.eq.s32.totalorder %s18, 1
      %p128 = por %p126, %p127
      %p130 = scmp.ne.s32.totalorder %s113, %s129
      %p131 = scmp.eq.s32.totalorder %s18, 0
      %p132 = por %p130, %p131
      %p133 = scmp.le.s32.totalorder 1, %s12
      %p134 = scmp.lt.s32.totalorder %s12, 3
      %p135 = pnand %p133, %p134
      %p136 = pneg %p135
      // Predicated region
      $region9: #{graph_convolution.3} parent=5 // pred_check
        _
      $region10: #{graph_convolution.3} parent=5 // pred_check_branch
        %138 = sbr.rel (%p135) target = $region12
      $region11: #{graph_convolution.3} parent=5 // pred_region
        %s139 = ssub.s32 %s12, 1
        // Predicated region
        $region13: #{graph_convolution.3} parent=11 // pred_check
          %p140 = pneg %p78
        $region14: #{graph_convolution.3} parent=11 // pred_check_branch
          %142 = sbr.rel (%p140) target = $region16
        $region15: #{graph_convolution.3} parent=11 // pred_region
          %s143 = smul.u32 16, %s22
          %p144 = scmp.lt.s32.totalorder %s143, 15
          %s145 = scalar_select %p144, %s143, 15
          %s146 = smul.addr %s145, 8
          %s147 = scalar_lea.vmem %s1, %s146
          %s148 = smul.u32 16, %s22
        $region16: #{graph_convolution.3} parent=11 // pred_fallthru
          _
        // Predicated region
        $region17: #{graph_convolution.3} parent=11 // pred_check
          %p149 = pneg %p99
        $region18: #{graph_convolution.3} parent=11 // pred_check_branch
          %151 = sbr.rel (%p149) target = $region20
        $region19: #{graph_convolution.3} parent=11 // pred_region
          _
        $region20: #{graph_convolution.3} parent=11 // pred_fallthru
          _
      $region12: #{graph_convolution.3} parent=5 // pred_fallthru
        _
      %p152 = scmp.lt.s32.totalorder %s12, 2
      // Predicated region
      $region21: #{graph_convolution.3} parent=5 // pred_check
        %p153 = pneg %p152
      $region22: #{graph_convolution.3} parent=5 // pred_check_branch
        %155 = sbr.rel (%p153) target = $region24
      $region23: #{graph_convolution.3} parent=5 // pred_region
        // Predicated region
        $region25: #{graph_convolution.3} parent=23 // pred_check
          %p156 = pneg %p46
        $region26: #{graph_convolution.3} parent=23 // pred_check_branch
          %158 = sbr.rel (%p156) target = $region28
        $region27: #{graph_convolution.3} parent=23 // pred_region
          %p159 = scmp.lt.s32.totalorder %s19, 1
          %s160 = scalar_select %p159, %s19, 1
          %p161 = scmp.lt.s32.totalorder %s20, 0
          %s162 = scalar_select %p161, %s20, 0
          %s163 = sadd.s32 %s162, %s160
          %s164 = smul.addr %s163, 8
          %s165 = scalar_lea.vmem %s0, %s164
        $region28: #{graph_convolution.3} parent=23 // pred_fallthru
          _
      $region24: #{graph_convolution.3} parent=5 // pred_fallthru
        _
      %p166 = scmp.le.s32.totalorder 1, %s12
      %p167 = scmp.lt.s32.totalorder %s12, 3
      %p168 = pnand %p166, %p167
      %p169 = pneg %p168
      // Predicated region
      $region29: #{graph_convolution.3} parent=5 // pred_check
        _
      $region30: #{graph_convolution.3} parent=5 // pred_check_branch
        %171 = sbr.rel (%p168) target = $region32
      $region31: #{graph_convolution.3} parent=5 // pred_region
        %s172 = ssub.s32 %s12, 1
        %p173 = scmp.lt.s32.totalorder %s21, 1
        %s174 = scalar_select %p173, %s21, 1
        %p175 = scmp.lt.s32.totalorder %s22, 0
        %s176 = scalar_select %p175, %s22, 0
        %s177 = sadd.s32 %s176, %s174
        %s178 = smul.addr %s177, 8
        %s179 = scalar_lea.vmem %s0, %s178
        %p180 = pneg %p52
        %p181 = pneg %p49
        %s182 = smul.u32 16, %s22
        %p183 = scmp.lt.s32.totalorder %s182, 15
        %s184 = scalar_select %p183, %s182, 15
        %s185 = smul.addr %s184, 8
        %s186 = scalar_lea.vmem %s1, %s185
        %p187 = pneg %p78
        %p188 = pneg %p75
        %p189 = pneg %p99
        %p190 = pneg %p96
        %p191 = pneg %p125
        %p192 = pneg %p122
        %s193 = sand.u32 %s112, 1
        %s194 = scalar_lea.sflag [#allocation4], %s193
        %s195 = sand.u32 %s112, 1
        %s196 = smul.addr %s195, 8
        %s197 = scalar_lea.vmem [#allocation3], %s196
        %p198 = scmp.lt.s32.totalorder %s21, 1
        %s199 = scalar_select %p198, %s21, 1
        %p200 = scmp.lt.s32.totalorder %s22, 0
        %s201 = scalar_select %p200, %s22, 0
        %s202 = sadd.s32 %s201, %s199
        %s203 = smul.addr %s202, 8
        %s204 = scalar_lea.vmem %s0, %s203
        %s205 = smul.u32 16, %s22
        %p206 = scmp.lt.s32.totalorder %s205, 15
        %s207 = scalar_select %p206, %s205, 15
        %s208 = smul.addr %s207, 8
        %s209 = scalar_lea.vmem %s1, %s208
        %s210 = smul.u32 16, %s22
        %p211 = scmp.eq.s32.totalorder %s22, 0
        // Predicated region
        $region33: #{graph_convolution.3} parent=31 // pred_check
          %p212 = pneg %p211
        $region34: #{graph_convolution.3} parent=31 // pred_check_branch
          %214 = sbr.rel (%p212) target = $region36
        $region35: #{graph_convolution.3} parent=31 // pred_region
          %215 = vst [vmem:[#allocation2] sm:$0xff] 0.0
        $region36: #{graph_convolution.3} parent=31 // pred_fallthru
          _
        %v216 = vld [vmem:[%s209] sm:$0xff]
        %v217 = vld [vmem:[%s209 + $0x8] sm:$0xff]
        %v218 = vld [vmem:[%s209 + $0x10] sm:$0xff]
        %v219 = vld [vmem:[%s209 + $0x18] sm:$0xff]
        %v220 = vld [vmem:[%s209 + $0x20] sm:$0xff]
        %v221 = vld [vmem:[%s209 + $0x28] sm:$0xff]
        %v222 = vld [vmem:[%s209 + $0x30] sm:$0xff]
        %v223 = vld [vmem:[%s209 + $0x38] sm:$0xff]
        %v224 = vld [vmem:[%s209 + $0x40] sm:$0xff]
        %v225 = vld [vmem:[%s209 + $0x48] sm:$0xff]
        %v226 = vld [vmem:[%s209 + $0x50] sm:$0xff]
        %v227 = vld [vmem:[%s209 + $0x58] sm:$0xff]
        %v228 = vld [vmem:[%s209 + $0x60] sm:$0xff]
        %v229 = vld [vmem:[%s209 + $0x68] sm:$0xff]
        %v230 = vld [vmem:[%s209 + $0x70] sm:$0xff]
        %v231 = vld [vmem:[%s209 + $0x78] sm:$0xff]
        %v232 = vld [vmem:[%s204] sm:$0xff]
        %v233 = vld [vmem:[#allocation2] sm:$0xff]
        %234 = vmatprep.subr.mxu0 0.0
        %235 = vmatpush1.msra.mxu0 %v231
        %236 = vmatprep.subr.mxu0 0.0
        %237 = vmatpush1.msra.mxu0 %v230
        %238 = vmatprep.subr.mxu0 0.0
        %239 = vmatpush1.msra.mxu0 %v229
        %240 = vmatprep.subr.mxu0 0.0
        %241 = vmatpush1.msra.mxu0 %v228
        %242 = vmatprep.subr.mxu0 0.0
        %243 = vmatpush1.msra.mxu0 %v227
        %244 = vmatprep.subr.mxu0 0.0
        %245 = vmatpush1.msra.mxu0 %v226
        %246 = vmatprep.subr.mxu0 0.0
        %247 = vmatpush1.msra.mxu0 %v225
        %248 = vmatprep.subr.mxu0 0.0
        %249 = vmatpush1.msra.mxu0 %v224
        %250 = vmatprep.subr.mxu0 0.0
        %251 = vmatpush1.msra.mxu0 %v223
        %252 = vmatprep.subr.mxu0 0.0
        %253 = vmatpush1.msra.mxu0 %v222
        %254 = vmatprep.subr.mxu0 0.0
        %255 = vmatpush1.msra.mxu0 %v221
        %256 = vmatprep.subr.mxu0 0.0
        %257 = vmatpush1.msra.mxu0 %v220
        %258 = vmatprep.subr.mxu0 0.0
        %259 = vmatpush1.msra.mxu0 %v219
        %260 = vmatprep.subr.mxu0 0.0
        %261 = vmatpush1.msra.mxu0 %v218
        %262 = vmatprep.subr.mxu0 0.0
        %263 = vmatpush1.msra.mxu0 %v217
        %264 = vmatprep.subr.mxu0 0.0
        %265 = vmatpush1.msra.mxu0 %v216
        %266 = vmatprep.subr.mxu0 0.0
        %267 = vmatpush2.msra.mxu0 0.0
        %268 = vmatprep.subr.mxu0 0.0
        %269 = vmatpush2.msra.mxu0 0.0
        %270 = vmatprep.subr.mxu0 0.0
        %271 = vmatpush2.msra.mxu0 0.0
        %272 = vmatprep.subr.mxu0 0.0
        %273 = vmatpush2.msra.mxu0 0.0
        %274 = vmatprep.subr.mxu0 0.0
        %275 = vmatpush2.msra.mxu0 0.0
        %276 = vmatprep.subr.mxu0 0.0
        %277 = vmatpush2.msra.mxu0 0.0
        %278 = vmatprep.subr.mxu0 0.0
        %279 = vmatpush2.msra.mxu0 0.0
        %280 = vmatprep.subr.mxu0 0.0
        %281 = vmatpush2.msra.mxu0 0.0
        %282 = vmatprep.subr.mxu0 0.0
        %283 = vmatpush2.msra.mxu0 0.0
        %284 = vmatprep.subr.mxu0 0.0
        %285 = vmatpush2.msra.mxu0 0.0
        %286 = vmatprep.subr.mxu0 0.0
        %287 = vmatpush2.msra.mxu0 0.0
        %288 = vmatprep.subr.mxu0 0.0
        %289 = vmatpush2.msra.mxu0 0.0
        %290 = vmatprep.subr.mxu0 0.0
        %291 = vmatpush2.msra.mxu0 0.0
        %292 = vmatprep.subr.mxu0 0.0
        %293 = vmatpush2.msra.mxu0 0.0
        %294 = vmatprep.subr.mxu0 0.0
        %295 = vmatpush2.msra.mxu0 0.0
        %296 = vmatprep.subr.mxu0 0.0
        %297 = vmatpush2.msra.mxu0 0.0
        %298 = vmatprep.mubr.f32.mxu0 0.0
        %299 = vmatmul.mubr.f32.gmra.mxu0 %v232
        %v300 = vpop.f32.mrf.mxu0
        %v301 = vadd.f32 0.0, %v300
        %v302 = vpop.f32.mrf.mxu0
        %303 = vdwg.mxu0
        %v304 = vadd.f32 %v233, %v301
        %305 = vst [vmem:[#allocation2] sm:$0xff] %v304
        // Predicated region
        $region37: #{graph_convolution.3} parent=31 // pred_check
          %p306 = pneg %p211
        $region38: #{graph_convolution.3} parent=31 // pred_check_branch
          %308 = sbr.rel (%p306) target = $region40
        $region39: #{graph_convolution.3} parent=31 // pred_region
          %v309 = vld [vmem:[#allocation2] sm:$0xff]
          %v310 = vld [vmem:[%s2] sm:$0x1]
          %v312 = vlaneseq
          %v313 = vshrl.u32 %v312, 7
          %v314 = vsub.s32 0, %v313
          %v315 = vrot.slane %v310, %v314
          %v317 = vadd.f32 %v309, %v315
          %318 = vst [vmem:[%s197] sm:$0xff] %v317
        $region40: #{graph_convolution.3} parent=31 // pred_fallthru
          _
        %s319 = sand.u32 %s112, 1
        %s320 = scalar_lea.sflag [#allocation4], %s319
        %s321 = sand.u32 %s112, 1
        %s322 = smul.addr %s321, 8
        %s323 = scalar_lea.vmem [#allocation3], %s322
        // Predicated region
        $region41: #{graph_convolution.3} parent=31 // pred_check
          %p324 = pneg %p122
        $region42: #{graph_convolution.3} parent=31 // pred_check_branch
          %326 = sbr.rel (%p324) target = $region44
        $region43: #{graph_convolution.3} parent=31 // pred_region
          %s328 = ssub.s32 128, 128
          %329 = vsyncadd %s320, %s328
          %s330 = smul.addr %s21, 128
          %s331 = scalar_lea.hbm %s3, %s330
          %s333 = sshll.u32 %s323, 4
          %s334 = int_to_ptr.vmem [resolvable:$true] %s333
          %336 = dma.vmem_to_hbm [thread:$0]  %s334, 128, %s331, %s320
        $region44: #{graph_convolution.3} parent=31 // pred_fallthru
          _
      $region32: #{graph_convolution.3} parent=5 // pred_fallthru
        _
      %p337 = scmp.le.s32.totalorder 2, %s12
      // Predicated region
      $region45: #{graph_convolution.3} parent=5 // pred_check
        %p338 = pneg %p337
      $region46: #{graph_convolution.3} parent=5 // pred_check_branch
        %340 = sbr.rel (%p338) target = $region48
      $region47: #{graph_convolution.3} parent=5 // pred_region
        %s341 = ssub.s32 %s12, 2
        // Predicated region
        $region49: #{graph_convolution.3} parent=47 // pred_check
          %p342 = pneg %p128
        $region50: #{graph_convolution.3} parent=47 // pred_check_branch
          %344 = sbr.rel (%p342) target = $region52
        $region51: #{graph_convolution.3} parent=47 // pred_region
          %s345 = sand.u32 %s113, 1
          %s346 = scalar_lea.sflag [#allocation4], %s345
          %s347 = sand.u32 %s113, 1
          %s348 = smul.addr %s347, 8
          %s349 = scalar_lea.vmem [#allocation3], %s348
          %350 = dma.done %s346, 128
        $region52: #{graph_convolution.3} parent=47 // pred_fallthru
          _
      $region48: #{graph_convolution.3} parent=5 // pred_fallthru
        _
    $region6: #{graph_convolution.3} parent=1 // loop_footer
      %s16 = sadd.s32 1, %s12
    $region7: #{graph_convolution.3} parent=1 // loop_footer_branch
      %11 = sbr.rel target = $region3
    $region8: #{graph_convolution.3} parent=1 // loop_exit
      _
    %351 = vsyncpa [#allocation4], 1
    %s352 = scalar_lea.sflag [#allocation4], 1
    %353 = vsyncpa %s352, 1

</llo_original>
